<compile_context>
chip_gen: v5e
topology: v5e:2x2
jax: 0.10.0
libtpu: 0.0.40
codegen_flags: <defaults>
</compile_context>

<pallas_src>
import jax
import jax.numpy as jnp
from jax import lax
from jax.experimental import pallas as pl
from jax.experimental.pallas import tpu as pltpu


def _round_up(x, m):
    return ((x + m - 1) // m) * m


def pack_params(emb, w_ih, w_hh, b_ih, b_hh, w_fc, b_fc):
    """One-time (weight-load time) parameter fusion & packing.

    Layout of the returned (rows, 4H) f32 array:
        rows [0, V)        : Wx  = emb @ W_ih^T        (hoisted input projection)
        row   V            : b   = b_ih + b_hh         (folded LSTM bias)
        row   V + 1        : [w_fc (H lanes), b_fc, 0] (fc weights + bias)
        rows [row_whh, +H) : W_hh^T                    (row_whh = V+2 rounded to 8)
    Gate columns are reordered from torch's [i, f, g, o] to [i, f, o, g].
    """
    V, _ = emb.shape
    H4 = w_ih.shape[0]
    H = H4 // 4

    def reorder_gates(m):  # gate blocks along axis 0: [i, f, g, o] -> [i, f, o, g]
        return jnp.concatenate(
            [m[0:H], m[H:2 * H], m[3 * H:4 * H], m[2 * H:3 * H]], axis=0)

    w_ih_r = reorder_gates(w_ih.astype(jnp.float32))                    # (4H, E)
    w_hh_r = reorder_gates(w_hh.astype(jnp.float32))                    # (4H, H)
    b_r = reorder_gates((b_ih + b_hh).astype(jnp.float32)).reshape(1, H4)

    wx = jnp.dot(emb.astype(jnp.float32), w_ih_r.T)                     # (V, 4H)
    whh_t = w_hh_r.T                                                    # (H, 4H)

    fc_row = jnp.zeros((1, H4), jnp.float32)
    fc_row = fc_row.at[0, 0:H].set(w_fc.astype(jnp.float32).reshape(H))
    fc_row = fc_row.at[0, H].set(b_fc.astype(jnp.float32).reshape(())[()])

    row_whh = _round_up(V + 2, 8)
    rows = row_whh + H
    packed = jnp.zeros((rows, H4), jnp.float32)
    packed = packed.at[0:V].set(wx)
    packed = packed.at[V:V + 1].set(b_r)
    packed = packed.at[V + 1:V + 2].set(fc_row)
    packed = packed.at[row_whh:row_whh + H].set(whh_t)
    return packed


def _make_kernel(*, V, H, T, B):
    H4 = 4 * H
    row_whh = _round_up(V + 2, 8)

    def kernel(ids_ref, w_ref, out_ref):
        # ---- one-time loads (static ref slices, off the recurrence chain) ----
        wx = w_ref[0:V, :]                         # (V, 4H) hoisted input projection
        bias = w_ref[V:V + 1, :]                   # (1, 4H) folded LSTM bias
        fc_row = w_ref[V + 1:V + 2, :]             # (1, 4H) [w_fc | b_fc | 0...]
        whh = w_ref[row_whh:row_whh + H, :]        # (H, 4H) recurrent weights (W_hh^T)

        bias_b = jnp.broadcast_to(bias, (B, H4))   # hoisted: no per-iter broadcast_in_dim
        ids = ids_ref[...]                         # (B, T) int32, native layout
        vocab_iota = lax.broadcasted_iota(jnp.int32, (B, V), 1)

        h = jnp.zeros((B, H), jnp.float32)
        c = jnp.zeros((B, H), jnp.float32)

        # ---- fully unrolled recurrence; h / c live in vregs ----
        for t in range(T):
            # Embedding + input projection for step t: a tiny one-hot MXU matmul
            # that does not depend on h, so the scheduler overlaps it with the
            # EUP/VPU tail of the previous step.
            onehot_t = (ids[:, t:t + 1] == vocab_iota).astype(jnp.float32)   # (B, V)
            gates = (jnp.dot(onehot_t, wx, preferred_element_type=jnp.float32)
                     + jnp.dot(h, whh, preferred_element_type=jnp.float32)
                     + bias_b)                                               # (B, 4H)
            # Gate order [i, f, o, g]: sigmoid over the aligned 0:3H prefix,
            # tanh only over the g band.
            sg = jax.nn.sigmoid(gates[:, 0:3 * H])        # (B, 3H)
            g_g = jnp.tanh(gates[:, 3 * H:4 * H])         # (B, H)
            c = sg[:, H:2 * H] * c + sg[:, 0:H] * g_g     # f*c + i*g
            h = sg[:, 2 * H:3 * H] * jnp.tanh(c)          # o*tanh(c), lands at lanes 0:H

        # ---- fc(last hidden) + sigmoid: VPU multiply + cross-lane reduce ----
        w_fc = fc_row[:, 0:H]                      # (1, H)
        b_fc = fc_row[:, H:H + 1]                  # (1, 1)
        logits = jnp.sum(h * w_fc, axis=-1, keepdims=True) + b_fc           # (B, 1)
        out_ref[...] = jax.nn.sigmoid(logits)

    return kernel


def protein_discriminator(ids, packed_w, *, vocab_size, hidden_dim):
    """Per-call path: ids (B, T) int32, packed_w from pack_params(). Returns (B, 1)."""
    B, T = ids.shape
    kernel = _make_kernel(V=vocab_size, H=hidden_dim, T=T, B=B)
    vmem = pl.BlockSpec(memory_space=pltpu.MemorySpace.VMEM)
    return pl.pallas_call(
        kernel,
        out_shape=jax.ShapeDtypeStruct((B, 1), jnp.float32),
        in_specs=[vmem, vmem],
        out_specs=vmem,
    )(ids.astype(jnp.int32), packed_w)


def _reference_forward(ids, emb, w_ih, w_hh, b_ih, b_hh, w_fc, b_fc):
    """Pure-JAX reference matching torch.nn.LSTM / Linear semantics."""
    x = emb[ids]                                   # (B, T, E)
    B, T, _ = x.shape
    H = w_hh.shape[1]
    h = jnp.zeros((B, H), jnp.float32)
    c = jnp.zeros((B, H), jnp.float32)
    for t in range(T):
        gates = x[:, t] @ w_ih.T + b_ih + h @ w_hh.T + b_hh
        i = jax.nn.sigmoid(gates[:, 0:H])
        f = jax.nn.sigmoid(gates[:, H:2 * H])
        g = jnp.tanh(gates[:, 2 * H:3 * H])
        o = jax.nn.sigmoid(gates[:, 3 * H:4 * H])
        c = f * c + i * g
        h = o * jnp.tanh(c)
    return jax.nn.sigmoid(h @ w_fc.T + b_fc)


if __name__ == "__main__":
    # Small, module-consistent shapes: vocab (input_dim)=24, embedding_dim=32,
    # hidden_dim=32, batch=8, sequence length=8.
    V, E, H = 24, 32, 32
    B, T = 8, 8

    key = jax.random.PRNGKey(0)
    ks = jax.random.split(key, 8)
    emb = 0.1 * jax.random.normal(ks[0], (V, E), jnp.float32)       # embedding.weight
    w_ih = 0.1 * jax.random.normal(ks[1], (4 * H, E), jnp.float32)  # lstm.weight_ih_l0
    w_hh = 0.1 * jax.random.normal(ks[2], (4 * H, H), jnp.float32)  # lstm.weight_hh_l0
    b_ih = 0.1 * jax.random.normal(ks[3], (4 * H,), jnp.float32)    # lstm.bias_ih_l0
    b_hh = 0.1 * jax.random.normal(ks[4], (4 * H,), jnp.float32)    # lstm.bias_hh_l0
    w_fc = 0.1 * jax.random.normal(ks[5], (1, H), jnp.float32)      # fc.weight
    b_fc = 0.1 * jax.random.normal(ks[6], (1,), jnp.float32)        # fc.bias
    ids = jax.random.randint(ks[7], (B, T), 0, V, jnp.int32)        # token ids

    # One-time weight fusion/packing (weight-load time, not per call).
    packed = jax.block_until_ready(
        pack_params(emb, w_ih, w_hh, b_ih, b_hh, w_fc, b_fc))

    out = protein_discriminator(ids, packed, vocab_size=V, hidden_dim=H)
    out = jax.block_until_ready(out)

    ref = _reference_forward(ids, emb, w_ih, w_hh, b_ih, b_hh, w_fc, b_fc)
    assert out.shape == (B, 1), out.shape
    assert jnp.all(jnp.isfinite(out))
    assert jnp.allclose(out, ref, atol=1e-4, rtol=1e-4), (out, ref)

    print("KERNEL_OK")
</pallas_src>

<mosaic_0001>
module attributes {stable_mosaic.version = 11 : i64} {
  func.func @kernel(%arg0: memref<8x8xi32, #tpu.memory_space<vmem>>, %arg1: memref<64x128xf32, #tpu.memory_space<vmem>>, %arg2: memref<8x1xf32, #tpu.memory_space<vmem>>) attributes {dimension_semantics = [], scalar_prefetch = 0 : i64, scratch_operands = 0 : i64, tpu.core_type = #tpu.core_type<tc>} {
    %c0 = arith.constant 0 : index
    %c0_0 = arith.constant 0 : index
    %0 = vector.load %arg1[%c0, %c0_0] : memref<64x128xf32, #tpu.memory_space<vmem>>, vector<24x128xf32>
    %c24 = arith.constant 24 : index
    %c0_1 = arith.constant 0 : index
    %1 = vector.load %arg1[%c24, %c0_1] : memref<64x128xf32, #tpu.memory_space<vmem>>, vector<1x128xf32>
    %c25 = arith.constant 25 : index
    %c0_2 = arith.constant 0 : index
    %2 = vector.load %arg1[%c25, %c0_2] : memref<64x128xf32, #tpu.memory_space<vmem>>, vector<1x128xf32>
    %c32 = arith.constant 32 : index
    %c0_3 = arith.constant 0 : index
    %3 = vector.load %arg1[%c32, %c0_3] : memref<64x128xf32, #tpu.memory_space<vmem>>, vector<32x128xf32>
    %4 = vector.shape_cast %1 : vector<1x128xf32> to vector<1x128xf32>
    %5 = vector.broadcast %4 : vector<1x128xf32> to vector<8x128xf32>
    %c0_4 = arith.constant 0 : index
    %c0_5 = arith.constant 0 : index
    %6 = vector.load %arg0[%c0_4, %c0_5] : memref<8x8xi32, #tpu.memory_space<vmem>>, vector<8x8xi32>
    %7 = tpu.iota {dimensions = array<i32: 1>} : vector<8x24xi32>
    %cst = arith.constant 0.000000e+00 : f32
    %8 = vector.broadcast %cst : f32 to vector<8x32xf32>
    %cst_6 = arith.constant 0.000000e+00 : f32
    %9 = vector.broadcast %cst_6 : f32 to vector<8x32xf32>
    %10 = vector.extract_strided_slice %6 {offsets = [0, 0], sizes = [8, 1], strides = [1, 1]} : vector<8x8xi32> to vector<8x1xi32>
    %11 = vector.broadcast %10 : vector<8x1xi32> to vector<8x24xi32>
    %12 = arith.cmpi eq, %11, %7 : vector<8x24xi32>
    %13 = arith.extui %12 : vector<8x24xi1> to vector<8x24xi32>
    %14 = arith.sitofp %13 : vector<8x24xi32> to vector<8x24xf32>
    %cst_7 = arith.constant dense<0.000000e+00> : vector<8x128xf32>
    %15 = tpu.matmul %14, %0, %cst_7 {dimension_numbers = #tpu.dot_dimension_numbers<[1], [0], [0], [1], [0, 0, 1, 1], [], []>} : vector<8x24xf32>, vector<24x128xf32>, vector<8x128xf32> -> vector<8x128xf32>
    %cst_8 = arith.constant dense<0.000000e+00> : vector<8x128xf32>
    %16 = tpu.matmul %8, %3, %cst_8 {dimension_numbers = #tpu.dot_dimension_numbers<[1], [0], [0], [1], [0, 0, 1, 1], [], []>} : vector<8x32xf32>, vector<32x128xf32>, vector<8x128xf32> -> vector<8x128xf32>
    %17 = arith.addf %15, %16 : vector<8x128xf32>
    %18 = arith.addf %17, %5 : vector<8x128xf32>
    %19 = vector.extract_strided_slice %18 {offsets = [0, 0], sizes = [8, 96], strides = [1, 1]} : vector<8x128xf32> to vector<8x96xf32>
    %20 = arith.negf %19 : vector<8x96xf32>
    %21 = math.exp %20 : vector<8x96xf32>
    %cst_9 = arith.constant 1.000000e+00 : f32
    %22 = vector.broadcast %cst_9 : f32 to vector<8x96xf32>
    %23 = arith.addf %22, %21 : vector<8x96xf32>
    %24 = arith.divf %22, %23 : vector<8x96xf32>
    %25 = vector.extract_strided_slice %18 {offsets = [0, 96], sizes = [8, 32], strides = [1, 1]} : vector<8x128xf32> to vector<8x32xf32>
    %26 = math.tanh %25 : vector<8x32xf32>
    %27 = vector.extract_strided_slice %24 {offsets = [0, 32], sizes = [8, 32], strides = [1, 1]} : vector<8x96xf32> to vector<8x32xf32>
    %28 = arith.mulf %27, %9 : vector<8x32xf32>
    %29 = vector.extract_strided_slice %24 {offsets = [0, 0], sizes = [8, 32], strides = [1, 1]} : vector<8x96xf32> to vector<8x32xf32>
    %30 = arith.mulf %29, %26 : vector<8x32xf32>
    %31 = arith.addf %28, %30 : vector<8x32xf32>
    %32 = vector.extract_strided_slice %24 {offsets = [0, 64], sizes = [8, 32], strides = [1, 1]} : vector<8x96xf32> to vector<8x32xf32>
    %33 = math.tanh %31 : vector<8x32xf32>
    %34 = arith.mulf %32, %33 : vector<8x32xf32>
    %35 = vector.extract_strided_slice %6 {offsets = [0, 1], sizes = [8, 1], strides = [1, 1]} : vector<8x8xi32> to vector<8x1xi32>
    %36 = vector.broadcast %35 : vector<8x1xi32> to vector<8x24xi32>
    %37 = arith.cmpi eq, %36, %7 : vector<8x24xi32>
    %38 = arith.extui %37 : vector<8x24xi1> to vector<8x24xi32>
    %39 = arith.sitofp %38 : vector<8x24xi32> to vector<8x24xf32>
    %cst_10 = arith.constant dense<0.000000e+00> : vector<8x128xf32>
    %40 = tpu.matmul %39, %0, %cst_10 {dimension_numbers = #tpu.dot_dimension_numbers<[1], [0], [0], [1], [0, 0, 1, 1], [], []>} : vector<8x24xf32>, vector<24x128xf32>, vector<8x128xf32> -> vector<8x128xf32>
    %cst_11 = arith.constant dense<0.000000e+00> : vector<8x128xf32>
    %41 = tpu.matmul %34, %3, %cst_11 {dimension_numbers = #tpu.dot_dimension_numbers<[1], [0], [0], [1], [0, 0, 1, 1], [], []>} : vector<8x32xf32>, vector<32x128xf32>, vector<8x128xf32> -> vector<8x128xf32>
    %42 = arith.addf %40, %41 : vector<8x128xf32>
    %43 = arith.addf %42, %5 : vector<8x128xf32>
    %44 = vector.extract_strided_slice %43 {offsets = [0, 0], sizes = [8, 96], strides = [1, 1]} : vector<8x128xf32> to vector<8x96xf32>
    %45 = arith.negf %44 : vector<8x96xf32>
    %46 = math.exp %45 : vector<8x96xf32>
    %cst_12 = arith.constant 1.000000e+00 : f32
    %47 = vector.broadcast %cst_12 : f32 to vector<8x96xf32>
    %48 = arith.addf %47, %46 : vector<8x96xf32>
    %49 = arith.divf %47, %48 : vector<8x96xf32>
    %50 = vector.extract_strided_slice %43 {offsets = [0, 96], sizes = [8, 32], strides = [1, 1]} : vector<8x128xf32> to vector<8x32xf32>
    %51 = math.tanh %50 : vector<8x32xf32>
    %52 = vector.extract_strided_slice %49 {offsets = [0, 32], sizes = [8, 32], strides = [1, 1]} : vector<8x96xf32> to vector<8x32xf32>
    %53 = arith.mulf %52, %31 : vector<8x32xf32>
    %54 = vector.extract_strided_slice %49 {offsets = [0, 0], sizes = [8, 32], strides = [1, 1]} : vector<8x96xf32> to vector<8x32xf32>
    %55 = arith.mulf %54, %51 : vector<8x32xf32>
    %56 = arith.addf %53, %55 : vector<8x32xf32>
    %57 = vector.extract_strided_slice %49 {offsets = [0, 64], sizes = [8, 32], strides = [1, 1]} : vector<8x96xf32> to vector<8x32xf32>
    %58 = math.tanh %56 : vector<8x32xf32>
    %59 = arith.mulf %57, %58 : vector<8x32xf32>
    %60 = vector.extract_strided_slice %6 {offsets = [0, 2], sizes = [8, 1], strides = [1, 1]} : vector<8x8xi32> to vector<8x1xi32>
    %61 = vector.broadcast %60 : vector<8x1xi32> to vector<8x24xi32>
    %62 = arith.cmpi eq, %61, %7 : vector<8x24xi32>
    %63 = arith.extui %62 : vector<8x24xi1> to vector<8x24xi32>
    %64 = arith.sitofp %63 : vector<8x24xi32> to vector<8x24xf32>
    %cst_13 = arith.constant dense<0.000000e+00> : vector<8x128xf32>
    %65 = tpu.matmul %64, %0, %cst_13 {dimension_numbers = #tpu.dot_dimension_numbers<[1], [0], [0], [1], [0, 0, 1, 1], [], []>} : vector<8x24xf32>, vector<24x128xf32>, vector<8x128xf32> -> vector<8x128xf32>
    %cst_14 = arith.constant dense<0.000000e+00> : vector<8x128xf32>
    %66 = tpu.matmul %59, %3, %cst_14 {dimension_numbers = #tpu.dot_dimension_numbers<[1], [0], [0], [1], [0, 0, 1, 1], [], []>} : vector<8x32xf32>, vector<32x128xf32>, vector<8x128xf32> -> vector<8x128xf32>
    %67 = arith.addf %65, %66 : vector<8x128xf32>
    %68 = arith.addf %67, %5 : vector<8x128xf32>
    %69 = vector.extract_strided_slice %68 {offsets = [0, 0], sizes = [8, 96], strides = [1, 1]} : vector<8x128xf32> to vector<8x96xf32>
    %70 = arith.negf %69 : vector<8x96xf32>
    %71 = math.exp %70 : vector<8x96xf32>
    %cst_15 = arith.constant 1.000000e+00 : f32
    %72 = vector.broadcast %cst_15 : f32 to vector<8x96xf32>
    %73 = arith.addf %72, %71 : vector<8x96xf32>
    %74 = arith.divf %72, %73 : vector<8x96xf32>
    %75 = vector.extract_strided_slice %68 {offsets = [0, 96], sizes = [8, 32], strides = [1, 1]} : vector<8x128xf32> to vector<8x32xf32>
    %76 = math.tanh %75 : vector<8x32xf32>
    %77 = vector.extract_strided_slice %74 {offsets = [0, 32], sizes = [8, 32], strides = [1, 1]} : vector<8x96xf32> to vector<8x32xf32>
    %78 = arith.mulf %77, %56 : vector<8x32xf32>
    %79 = vector.extract_strided_slice %74 {offsets = [0, 0], sizes = [8, 32], strides = [1, 1]} : vector<8x96xf32> to vector<8x32xf32>
    %80 = arith.mulf %79, %76 : vector<8x32xf32>
    %81 = arith.addf %78, %80 : vector<8x32xf32>
    %82 = vector.extract_strided_slice %74 {offsets = [0, 64], sizes = [8, 32], strides = [1, 1]} : vector<8x96xf32> to vector<8x32xf32>
    %83 = math.tanh %81 : vector<8x32xf32>
    %84 = arith.mulf %82, %83 : vector<8x32xf32>
    %85 = vector.extract_strided_slice %6 {offsets = [0, 3], sizes = [8, 1], strides = [1, 1]} : vector<8x8xi32> to vector<8x1xi32>
    %86 = vector.broadcast %85 : vector<8x1xi32> to vector<8x24xi32>
    %87 = arith.cmpi eq, %86, %7 : vector<8x24xi32>
    %88 = arith.extui %87 : vector<8x24xi1> to vector<8x24xi32>
    %89 = arith.sitofp %88 : vector<8x24xi32> to vector<8x24xf32>
    %cst_16 = arith.constant dense<0.000000e+00> : vector<8x128xf32>
    %90 = tpu.matmul %89, %0, %cst_16 {dimension_numbers = #tpu.dot_dimension_numbers<[1], [0], [0], [1], [0, 0, 1, 1], [], []>} : vector<8x24xf32>, vector<24x128xf32>, vector<8x128xf32> -> vector<8x128xf32>
    %cst_17 = arith.constant dense<0.000000e+00> : vector<8x128xf32>
    %91 = tpu.matmul %84, %3, %cst_17 {dimension_numbers = #tpu.dot_dimension_numbers<[1], [0], [0], [1], [0, 0, 1, 1], [], []>} : vector<8x32xf32>, vector<32x128xf32>, vector<8x128xf32> -> vector<8x128xf32>
    %92 = arith.addf %90, %91 : vector<8x128xf32>
    %93 = arith.addf %92, %5 : vector<8x128xf32>
    %94 = vector.extract_strided_slice %93 {offsets = [0, 0], sizes = [8, 96], strides = [1, 1]} : vector<8x128xf32> to vector<8x96xf32>
    %95 = arith.negf %94 : vector<8x96xf32>
    %96 = math.exp %95 : vector<8x96xf32>
    %cst_18 = arith.constant 1.000000e+00 : f32
    %97 = vector.broadcast %cst_18 : f32 to vector<8x96xf32>
    %98 = arith.addf %97, %96 : vector<8x96xf32>
    %99 = arith.divf %97, %98 : vector<8x96xf32>
    %100 = vector.extract_strided_slice %93 {offsets = [0, 96], sizes = [8, 32], strides = [1, 1]} : vector<8x128xf32> to vector<8x32xf32>
    %101 = math.tanh %100 : vector<8x32xf32>
    %102 = vector.extract_strided_slice %99 {offsets = [0, 32], sizes = [8, 32], strides = [1, 1]} : vector<8x96xf32> to vector<8x32xf32>
    %103 = arith.mulf %102, %81 : vector<8x32xf32>
    %104 = vector.extract_strided_slice %99 {offsets = [0, 0], sizes = [8, 32], strides = [1, 1]} : vector<8x96xf32> to vector<8x32xf32>
    %105 = arith.mulf %104, %101 : vector<8x32xf32>
    %106 = arith.addf %103, %105 : vector<8x32xf32>
    %107 = vector.extract_strided_slice %99 {offsets = [0, 64], sizes = [8, 32], strides = [1, 1]} : vector<8x96xf32> to vector<8x32xf32>
    %108 = math.tanh %106 : vector<8x32xf32>
    %109 = arith.mulf %107, %108 : vector<8x32xf32>
    %110 = vector.extract_strided_slice %6 {offsets = [0, 4], sizes = [8, 1], strides = [1, 1]} : vector<8x8xi32> to vector<8x1xi32>
    %111 = vector.broadcast %110 : vector<8x1xi32> to vector<8x24xi32>
    %112 = arith.cmpi eq, %111, %7 : vector<8x24xi32>
    %113 = arith.extui %112 : vector<8x24xi1> to vector<8x24xi32>
    %114 = arith.sitofp %113 : vector<8x24xi32> to vector<8x24xf32>
    %cst_19 = arith.constant dense<0.000000e+00> : vector<8x128xf32>
    %115 = tpu.matmul %114, %0, %cst_19 {dimension_numbers = #tpu.dot_dimension_numbers<[1], [0], [0], [1], [0, 0, 1, 1], [], []>} : vector<8x24xf32>, vector<24x128xf32>, vector<8x128xf32> -> vector<8x128xf32>
    %cst_20 = arith.constant dense<0.000000e+00> : vector<8x128xf32>
    %116 = tpu.matmul %109, %3, %cst_20 {dimension_numbers = #tpu.dot_dimension_numbers<[1], [0], [0], [1], [0, 0, 1, 1], [], []>} : vector<8x32xf32>, vector<32x128xf32>, vector<8x128xf32> -> vector<8x128xf32>
    %117 = arith.addf %115, %116 : vector<8x128xf32>
    %118 = arith.addf %117, %5 : vector<8x128xf32>
    %119 = vector.extract_strided_slice %118 {offsets = [0, 0], sizes = [8, 96], strides = [1, 1]} : vector<8x128xf32> to vector<8x96xf32>
    %120 = arith.negf %119 : vector<8x96xf32>
    %121 = math.exp %120 : vector<8x96xf32>
    %cst_21 = arith.constant 1.000000e+00 : f32
    %122 = vector.broadcast %cst_21 : f32 to vector<8x96xf32>
    %123 = arith.addf %122, %121 : vector<8x96xf32>
    %124 = arith.divf %122, %123 : vector<8x96xf32>
    %125 = vector.extract_strided_slice %118 {offsets = [0, 96], sizes = [8, 32], strides = [1, 1]} : vector<8x128xf32> to vector<8x32xf32>
    %126 = math.tanh %125 : vector<8x32xf32>
    %127 = vector.extract_strided_slice %124 {offsets = [0, 32], sizes = [8, 32], strides = [1, 1]} : vector<8x96xf32> to vector<8x32xf32>
    %128 = arith.mulf %127, %106 : vector<8x32xf32>
    %129 = vector.extract_strided_slice %124 {offsets = [0, 0], sizes = [8, 32], strides = [1, 1]} : vector<8x96xf32> to vector<8x32xf32>
    %130 = arith.mulf %129, %126 : vector<8x32xf32>
    %131 = arith.addf %128, %130 : vector<8x32xf32>
    %132 = vector.extract_strided_slice %124 {offsets = [0, 64], sizes = [8, 32], strides = [1, 1]} : vector<8x96xf32> to vector<8x32xf32>
    %133 = math.tanh %131 : vector<8x32xf32>
    %134 = arith.mulf %132, %133 : vector<8x32xf32>
    %135 = vector.extract_strided_slice %6 {offsets = [0, 5], sizes = [8, 1], strides = [1, 1]} : vector<8x8xi32> to vector<8x1xi32>
    %136 = vector.broadcast %135 : vector<8x1xi32> to vector<8x24xi32>
    %137 = arith.cmpi eq, %136, %7 : vector<8x24xi32>
    %138 = arith.extui %137 : vector<8x24xi1> to vector<8x24xi32>
    %139 = arith.sitofp %138 : vector<8x24xi32> to vector<8x24xf32>
    %cst_22 = arith.constant dense<0.000000e+00> : vector<8x128xf32>
    %140 = tpu.matmul %139, %0, %cst_22 {dimension_numbers = #tpu.dot_dimension_numbers<[1], [0], [0], [1], [0, 0, 1, 1], [], []>} : vector<8x24xf32>, vector<24x128xf32>, vector<8x128xf32> -> vector<8x128xf32>
    %cst_23 = arith.constant dense<0.000000e+00> : vector<8x128xf32>
    %141 = tpu.matmul %134, %3, %cst_23 {dimension_numbers = #tpu.dot_dimension_numbers<[1], [0], [0], [1], [0, 0, 1, 1], [], []>} : vector<8x32xf32>, vector<32x128xf32>, vector<8x128xf32> -> vector<8x128xf32>
    %142 = arith.addf %140, %141 : vector<8x128xf32>
    %143 = arith.addf %142, %5 : vector<8x128xf32>
    %144 = vector.extract_strided_slice %143 {offsets = [0, 0], sizes = [8, 96], strides = [1, 1]} : vector<8x128xf32> to vector<8x96xf32>
    %145 = arith.negf %144 : vector<8x96xf32>
    %146 = math.exp %145 : vector<8x96xf32>
    %cst_24 = arith.constant 1.000000e+00 : f32
    %147 = vector.broadcast %cst_24 : f32 to vector<8x96xf32>
    %148 = arith.addf %147, %146 : vector<8x96xf32>
    %149 = arith.divf %147, %148 : vector<8x96xf32>
    %150 = vector.extract_strided_slice %143 {offsets = [0, 96], sizes = [8, 32], strides = [1, 1]} : vector<8x128xf32> to vector<8x32xf32>
    %151 = math.tanh %150 : vector<8x32xf32>
    %152 = vector.extract_strided_slice %149 {offsets = [0, 32], sizes = [8, 32], strides = [1, 1]} : vector<8x96xf32> to vector<8x32xf32>
    %153 = arith.mulf %152, %131 : vector<8x32xf32>
    %154 = vector.extract_strided_slice %149 {offsets = [0, 0], sizes = [8, 32], strides = [1, 1]} : vector<8x96xf32> to vector<8x32xf32>
    %155 = arith.mulf %154, %151 : vector<8x32xf32>
    %156 = arith.addf %153, %155 : vector<8x32xf32>
    %157 = vector.extract_strided_slice %149 {offsets = [0, 64], sizes = [8, 32], strides = [1, 1]} : vector<8x96xf32> to vector<8x32xf32>
    %158 = math.tanh %156 : vector<8x32xf32>
    %159 = arith.mulf %157, %158 : vector<8x32xf32>
    %160 = vector.extract_strided_slice %6 {offsets = [0, 6], sizes = [8, 1], strides = [1, 1]} : vector<8x8xi32> to vector<8x1xi32>
    %161 = vector.broadcast %160 : vector<8x1xi32> to vector<8x24xi32>
    %162 = arith.cmpi eq, %161, %7 : vector<8x24xi32>
    %163 = arith.extui %162 : vector<8x24xi1> to vector<8x24xi32>
    %164 = arith.sitofp %163 : vector<8x24xi32> to vector<8x24xf32>
    %cst_25 = arith.constant dense<0.000000e+00> : vector<8x128xf32>
    %165 = tpu.matmul %164, %0, %cst_25 {dimension_numbers = #tpu.dot_dimension_numbers<[1], [0], [0], [1], [0, 0, 1, 1], [], []>} : vector<8x24xf32>, vector<24x128xf32>, vector<8x128xf32> -> vector<8x128xf32>
    %cst_26 = arith.constant dense<0.000000e+00> : vector<8x128xf32>
    %166 = tpu.matmul %159, %3, %cst_26 {dimension_numbers = #tpu.dot_dimension_numbers<[1], [0], [0], [1], [0, 0, 1, 1], [], []>} : vector<8x32xf32>, vector<32x128xf32>, vector<8x128xf32> -> vector<8x128xf32>
    %167 = arith.addf %165, %166 : vector<8x128xf32>
    %168 = arith.addf %167, %5 : vector<8x128xf32>
    %169 = vector.extract_strided_slice %168 {offsets = [0, 0], sizes = [8, 96], strides = [1, 1]} : vector<8x128xf32> to vector<8x96xf32>
    %170 = arith.negf %169 : vector<8x96xf32>
    %171 = math.exp %170 : vector<8x96xf32>
    %cst_27 = arith.constant 1.000000e+00 : f32
    %172 = vector.broadcast %cst_27 : f32 to vector<8x96xf32>
    %173 = arith.addf %172, %171 : vector<8x96xf32>
    %174 = arith.divf %172, %173 : vector<8x96xf32>
    %175 = vector.extract_strided_slice %168 {offsets = [0, 96], sizes = [8, 32], strides = [1, 1]} : vector<8x128xf32> to vector<8x32xf32>
    %176 = math.tanh %175 : vector<8x32xf32>
    %177 = vector.extract_strided_slice %174 {offsets = [0, 32], sizes = [8, 32], strides = [1, 1]} : vector<8x96xf32> to vector<8x32xf32>
    %178 = arith.mulf %177, %156 : vector<8x32xf32>
    %179 = vector.extract_strided_slice %174 {offsets = [0, 0], sizes = [8, 32], strides = [1, 1]} : vector<8x96xf32> to vector<8x32xf32>
    %180 = arith.mulf %179, %176 : vector<8x32xf32>
    %181 = arith.addf %178, %180 : vector<8x32xf32>
    %182 = vector.extract_strided_slice %174 {offsets = [0, 64], sizes = [8, 32], strides = [1, 1]} : vector<8x96xf32> to vector<8x32xf32>
    %183 = math.tanh %181 : vector<8x32xf32>
    %184 = arith.mulf %182, %183 : vector<8x32xf32>
    %185 = vector.extract_strided_slice %6 {offsets = [0, 7], sizes = [8, 1], strides = [1, 1]} : vector<8x8xi32> to vector<8x1xi32>
    %186 = vector.broadcast %185 : vector<8x1xi32> to vector<8x24xi32>
    %187 = arith.cmpi eq, %186, %7 : vector<8x24xi32>
    %188 = arith.extui %187 : vector<8x24xi1> to vector<8x24xi32>
    %189 = arith.sitofp %188 : vector<8x24xi32> to vector<8x24xf32>
    %cst_28 = arith.constant dense<0.000000e+00> : vector<8x128xf32>
    %190 = tpu.matmul %189, %0, %cst_28 {dimension_numbers = #tpu.dot_dimension_numbers<[1], [0], [0], [1], [0, 0, 1, 1], [], []>} : vector<8x24xf32>, vector<24x128xf32>, vector<8x128xf32> -> vector<8x128xf32>
    %cst_29 = arith.constant dense<0.000000e+00> : vector<8x128xf32>
    %191 = tpu.matmul %184, %3, %cst_29 {dimension_numbers = #tpu.dot_dimension_numbers<[1], [0], [0], [1], [0, 0, 1, 1], [], []>} : vector<8x32xf32>, vector<32x128xf32>, vector<8x128xf32> -> vector<8x128xf32>
    %192 = arith.addf %190, %191 : vector<8x128xf32>
    %193 = arith.addf %192, %5 : vector<8x128xf32>
    %194 = vector.extract_strided_slice %193 {offsets = [0, 0], sizes = [8, 96], strides = [1, 1]} : vector<8x128xf32> to vector<8x96xf32>
    %195 = arith.negf %194 : vector<8x96xf32>
    %196 = math.exp %195 : vector<8x96xf32>
    %cst_30 = arith.constant 1.000000e+00 : f32
    %197 = vector.broadcast %cst_30 : f32 to vector<8x96xf32>
    %198 = arith.addf %197, %196 : vector<8x96xf32>
    %199 = arith.divf %197, %198 : vector<8x96xf32>
    %200 = vector.extract_strided_slice %193 {offsets = [0, 96], sizes = [8, 32], strides = [1, 1]} : vector<8x128xf32> to vector<8x32xf32>
    %201 = math.tanh %200 : vector<8x32xf32>
    %202 = vector.extract_strided_slice %199 {offsets = [0, 32], sizes = [8, 32], strides = [1, 1]} : vector<8x96xf32> to vector<8x32xf32>
    %203 = arith.mulf %202, %181 : vector<8x32xf32>
    %204 = vector.extract_strided_slice %199 {offsets = [0, 0], sizes = [8, 32], strides = [1, 1]} : vector<8x96xf32> to vector<8x32xf32>
    %205 = arith.mulf %204, %201 : vector<8x32xf32>
    %206 = arith.addf %203, %205 : vector<8x32xf32>
    %207 = vector.extract_strided_slice %199 {offsets = [0, 64], sizes = [8, 32], strides = [1, 1]} : vector<8x96xf32> to vector<8x32xf32>
    %208 = math.tanh %206 : vector<8x32xf32>
    %209 = arith.mulf %207, %208 : vector<8x32xf32>
    %210 = vector.extract_strided_slice %2 {offsets = [0, 0], sizes = [1, 32], strides = [1, 1]} : vector<1x128xf32> to vector<1x32xf32>
    %211 = vector.extract_strided_slice %2 {offsets = [0, 32], sizes = [1, 1], strides = [1, 1]} : vector<1x128xf32> to vector<1x1xf32>
    %212 = vector.broadcast %210 : vector<1x32xf32> to vector<8x32xf32>
    %213 = arith.mulf %209, %212 : vector<8x32xf32>
    %cst_31 = arith.constant dense<0.000000e+00> : vector<8xf32>
    %214 = vector.multi_reduction <add>, %213, %cst_31 [1] : vector<8x32xf32> to vector<8xf32>
    %215 = vector.shape_cast %214 : vector<8xf32> to vector<8x1xf32>
    %216 = vector.broadcast %211 : vector<1x1xf32> to vector<8x1xf32>
    %217 = arith.addf %215, %216 : vector<8x1xf32>
    %218 = arith.negf %217 : vector<8x1xf32>
    %219 = math.exp %218 : vector<8x1xf32>
    %cst_32 = arith.constant 1.000000e+00 : f32
    %220 = vector.broadcast %cst_32 : f32 to vector<8x1xf32>
    %221 = arith.addf %220, %219 : vector<8x1xf32>
    %222 = arith.divf %220, %221 : vector<8x1xf32>
    %c0_33 = arith.constant 0 : index
    %c0_34 = arith.constant 0 : index
    %223 = vector.load %arg2[%c0_33, %c0_34] : memref<8x1xf32, #tpu.memory_space<vmem>>, vector<8x1xf32>
    tpu.vector_store %arg2[%c0_33, %c0_34], %222 {strides = array<i32>} : memref<8x1xf32, #tpu.memory_space<vmem>>, vector<8x1xf32>,
    return
  }
}

</mosaic_0001>

<llo_original>
// kernel: tpu_custom_call.1
$region0: #{tpu_custom_call.1}
  #allocation0 [shape = 'u32[]', space=smem, size = 0x4, offset = 0x4, fixed_abs, tag = 'smem constant byte address 0x4 - core index']
  #allocation1 [shape = 'u32[72,128]{1,0:T(1,128)}', space=vmem, size = 0x9000, scoped, tag = 'internal scratch']
  %s0 = inlined_call_operand.hbm [shape: s32[8,8], index: 0, kind: input, shape index: {}]
  %s1 = inlined_call_operand.hbm [shape: f32[64,128], index: 1, kind: input, shape index: {}]
  %s2 = inlined_call_operand.vmem [shape: f32[8,1], index: 2, kind: output, shape index: {}]
  %s3 = sld [smem:[#allocation0]]
  $region26: #{tpu_custom_call.1} parent=0
    _
  %s5 = ssub.s32 1, %s3
  %s6 = scalar_select 0, %s5, %s3
  $region1: #{tpu_custom_call.1} parent=0
    #allocation2 [shape = 'u8[4096]{0}', space=vmem, size = 0x1000, scoped, tag = 'input window, operand 0, single buffered']
    #allocation3 [shape = 's32[1]{0}', space=sflag, size = 0x4, scoped, tag = 'scoped memory for tpu_custom_call.1']
    #allocation4 [shape = 'u8[32768]{0}', space=vmem, size = 0x8000, scoped, tag = 'input window, operand 1, single buffered']
    #allocation5 [shape = 's32[1]{0}', space=sflag, size = 0x4, scoped, tag = 'scoped memory for tpu_custom_call.1']
    %7 = vsyncpa [#allocation3], 0
    %8 = vsyncpa [#allocation5], 0
    // Predicated region
    $region2: #{tpu_custom_call.1} parent=1 // pred_check
      _
    $region3: #{tpu_custom_call.1} parent=1 // pred_check_branch
      %10 = sbr.rel (0) target = $region5
    $region4: #{tpu_custom_call.1} parent=1 // pred_region
      %12 = vsyncadd [#allocation3], 0
      %s14 = sshll.u32 %s0, 4
      %s15 = int_to_ptr.hbm [resolvable:$true] %s14
      %s16 = sshll.u32 [#allocation2], 4
      %s17 = int_to_ptr.vmem [resolvable:$true] %s16
      %19 = dma.hbm_to_vmem [thread:$0]  %s15, 128, %s17, [#allocation3]
    $region5: #{tpu_custom_call.1} parent=1 // pred_fallthru
      _
    // Predicated region
    $region6: #{tpu_custom_call.1} parent=1 // pred_check
      _
    $region7: #{tpu_custom_call.1} parent=1 // pred_check_branch
      %21 = sbr.rel (0) target = $region9
    $region8: #{tpu_custom_call.1} parent=1 // pred_region
      %23 = vsyncadd [#allocation5], 0
      %s24 = sshll.u32 %s1, 4
      %s25 = int_to_ptr.hbm [resolvable:$true] %s24
      %s26 = sshll.u32 [#allocation4], 4
      %s27 = int_to_ptr.vmem [resolvable:$true] %s26
      %32 = dma.hbm_to_vmem [thread:$0]  %s25, 1024, %s27, [#allocation5], 128, 128, 8
    $region9: #{tpu_custom_call.1} parent=1 // pred_fallthru
      _
    // Predicated region
    $region10: #{tpu_custom_call.1} parent=1 // pred_check
      _
    $region11: #{tpu_custom_call.1} parent=1 // pred_check_branch
      %34 = sbr.rel (0) target = $region13
    $region12: #{tpu_custom_call.1} parent=1 // pred_region
      %36 = dma.done [#allocation3], 128
    $region13: #{tpu_custom_call.1} parent=1 // pred_fallthru
      _
    // Predicated region
    $region14: #{tpu_custom_call.1} parent=1 // pred_check
      _
    $region15: #{tpu_custom_call.1} parent=1 // pred_check_branch
      %38 = sbr.rel (0) target = $region17
    $region16: #{tpu_custom_call.1} parent=1 // pred_region
      %40 = dma.done [#allocation5], 1024
    $region17: #{tpu_custom_call.1} parent=1 // pred_fallthru
      _
    %v41 = vld [vmem:[#allocation4] sm:$0xff]
    %v42 = vld [vmem:[#allocation4 + $0x8] sm:$0xff]
    %v43 = vld [vmem:[#allocation4 + $0x10] sm:$0xff]
    %v44 = vld [vmem:[#allocation4 + $0x18] sm:$0x1]
    %v45 = vld [vmem:[#allocation4 + $0x19] sm:$0x1]
    %v46 = vld [vmem:[#allocation4 + $0x20] sm:$0xff]
    %v47 = vld [vmem:[#allocation4 + $0x28] sm:$0xff]
    %v48 = vld [vmem:[#allocation4 + $0x30] sm:$0xff]
    %v49 = vld [vmem:[#allocation4 + $0x38] sm:$0xff]
    %v50 = vperm.slane %v44, 0
    %v51 = vld [vmem:[#allocation2] sm:$0xff]
    %v52 = vlaneseq
    %v53 = vand.u32 %v52, 127
    %54 = vset.pattern.permute.xlu0 0
    %55 = vperm.xlu0 %54, %v51
    %v56 = vpop.permute.xlu0 %55
    %vm57 = vcmp.eq.s32.totalorder %v56, %v53
    %v58 = vsel %vm57, 1, 0
    %v59 = vcvt.s32.f32 %v58
    %vm60 = vcmask 261120
    %v62 = vsel %vm60, 0.0, 0
    %64 = vmatpush.msra.mxu0 0.0
    %65 = vmatpush.msra.mxu0 0.0
    %66 = vmatpush.msra.mxu0 0.0
    %67 = vmatpush.msra.mxu0 0.0
    %68 = vmatpush.msra.mxu0 0.0
    %69 = vmatpush.msra.mxu0 0.0
    %70 = vmatpush.msra.mxu0 0.0
    %71 = vmatpush.msra.mxu0 0.0
    %72 = vmatpush.msra.mxu0 0.0
    %73 = vmatpush.msra.mxu0 0.0
    %74 = vmatpush.msra.mxu0 0.0
    %75 = vmatpush.msra.mxu0 0.0
    %76 = vmatpush.msra.mxu0 %v49
    %77 = vmatpush.msra.mxu0 %v48
    %78 = vmatpush.msra.mxu0 %v47
    %79 = vmatpush.msra.mxu0 %v46
    %80 = vmatmul.f32.gmra.mxu0 %v62
    %v81 = vpop.f32.mrf.mxu0
    %v82 = vadd.f32 0.0, %v81
    %83 = vdwg.mxu0
    %vm84 = vcmask 195584
    %v86 = vsel %vm84, %v59, 0
    %88 = vmatpush.msra.mxu0 0.0
    %89 = vmatpush.msra.mxu0 0.0
    %90 = vmatpush.msra.mxu0 0.0
    %91 = vmatpush.msra.mxu0 0.0
    %92 = vmatpush.msra.mxu0 0.0
    %93 = vmatpush.msra.mxu0 0.0
    %94 = vmatpush.msra.mxu0 0.0
    %95 = vmatpush.msra.mxu0 0.0
    %96 = vmatpush.msra.mxu0 0.0
    %97 = vmatpush.msra.mxu0 0.0
    %98 = vmatpush.msra.mxu0 0.0
    %99 = vmatpush.msra.mxu0 0.0
    %100 = vmatpush.msra.mxu0 0.0
    %101 = vmatpush.msra.mxu0 %v43
    %102 = vmatpush.msra.mxu0 %v42
    %103 = vmatpush.msra.mxu0 %v41
    %104 = vmatmul.f32.gmra.mxu0 %v86
    %v105 = vpop.f32.mrf.mxu0
    %v106 = vadd.f32 %v82, %v105
    %107 = vdwg.mxu0
    %v108 = vadd.f32 %v106, %v50
    %v109 = vxor.u32 %v108, 2147483648
    %v110 = vmul.f32 %v109, 1.442695
    %v111 = vpow.pop %v110
    %v112 = vadd.f32 %v111, 1.0
    %v113 = vrcp.pop %v112
    %v114 = vmul.f32 %v112, %v113
    %v115 = vsub.f32 1.0, %v114
    %v116 = vmul.f32 %v113, %v115
    %v117 = vadd.f32 %v113, %v116
    %vm118 = vweird.f32 %v112
    %vm119 = vweird.f32 %v113
    %vm120 = vmor %vm118, %vm119
    %v121 = vsel %vm120, %v113, %v117
    %v122 = vand.u32 2147483647, %v112
    %vm123 = vcmp.eq.f32.partialorder %v122, 8.507059e+37
    %v124 = vand.u32 %v112, 2147483648
    %v125 = vor.u32 1.1754944e-38, %v124
    %v126 = vsel %vm123, %v125, %v121
    %v127 = vmul.f32 1.0, %v126
    %v128 = vtanh.pop %v108
    %v129 = vmul.f32 %v127, 0.0
    %131 = vrot.lane.b32.xlu0 %v128, 32
    %v132 = vpop.permute.xlu0 %131
    %v134 = vmul.f32 %v127, %v132
    %136 = vrot.lane.b32.xlu0 %v134, 32
    %v137 = vpop.permute.xlu0 %136
    %v139 = vadd.f32 %v129, %v137
    %v140 = vtanh.pop %v139
    %142 = vrot.lane.b32.xlu0 %v140, 32
    %v143 = vpop.permute.xlu0 %142
    %v145 = vmul.f32 %v127, %v143
    %146 = vset.pattern.permute.xlu0 1
    %147 = vperm.xlu0 %146, %v51
    %v148 = vpop.permute.xlu0 %147
    %vm149 = vcmp.eq.s32.totalorder %v148, %v53
    %v150 = vsel %vm149, 1, 0
    %v151 = vcvt.s32.f32 %v150
    %153 = vrot.lane.b32.xlu0 %v145, 64
    %v154 = vpop.permute.xlu0 %153
    %v155 = vsel %vm60, %v154, 0
    %157 = vmatpush.msra.mxu0 0.0
    %158 = vmatpush.msra.mxu0 0.0
    %159 = vmatpush.msra.mxu0 0.0
    %160 = vmatpush.msra.mxu0 0.0
    %161 = vmatpush.msra.mxu0 0.0
    %162 = vmatpush.msra.mxu0 0.0
    %163 = vmatpush.msra.mxu0 0.0
    %164 = vmatpush.msra.mxu0 0.0
    %165 = vmatpush.msra.mxu0 0.0
    %166 = vmatpush.msra.mxu0 0.0
    %167 = vmatpush.msra.mxu0 0.0
    %168 = vmatpush.msra.mxu0 0.0
    %169 = vmatpush.msra.mxu0 %v49
    %170 = vmatpush.msra.mxu0 %v48
    %171 = vmatpush.msra.mxu0 %v47
    %172 = vmatpush.msra.mxu0 %v46
    %173 = vmatmul.f32.gmra.mxu0 %v155
    %v174 = vpop.f32.mrf.mxu0
    %v175 = vadd.f32 0.0, %v174
    %176 = vdwg.mxu0
    %v178 = vsel %vm84, %v151, 0
    %180 = vmatpush.msra.mxu0 0.0
    %181 = vmatpush.msra.mxu0 0.0
    %182 = vmatpush.msra.mxu0 0.0
    %183 = vmatpush.msra.mxu0 0.0
    %184 = vmatpush.msra.mxu0 0.0
    %185 = vmatpush.msra.mxu0 0.0
    %186 = vmatpush.msra.mxu0 0.0
    %187 = vmatpush.msra.mxu0 0.0
    %188 = vmatpush.msra.mxu0 0.0
    %189 = vmatpush.msra.mxu0 0.0
    %190 = vmatpush.msra.mxu0 0.0
    %191 = vmatpush.msra.mxu0 0.0
    %192 = vmatpush.msra.mxu0 0.0
    %193 = vmatpush.msra.mxu0 %v43
    %194 = vmatpush.msra.mxu0 %v42
    %195 = vmatpush.msra.mxu0 %v41
    %196 = vmatmul.f32.gmra.mxu0 %v178
    %v197 = vpop.f32.mrf.mxu0
    %v198 = vadd.f32 %v175, %v197
    %199 = vdwg.mxu0
    %v200 = vadd.f32 %v198, %v50
    %v201 = vxor.u32 %v200, 2147483648
    %v202 = vmul.f32 %v201, 1.442695
    %v203 = vpow.pop %v202
    %v204 = vadd.f32 %v203, 1.0
    %v205 = vrcp.pop %v204
    %v206 = vmul.f32 %v204, %v205
    %v207 = vsub.f32 1.0, %v206
    %v208 = vmul.f32 %v205, %v207
    %v209 = vadd.f32 %v205, %v208
    %vm210 = vweird.f32 %v204
    %vm211 = vweird.f32 %v205
    %vm212 = vmor %vm210, %vm211
    %v213 = vsel %vm212, %v205, %v209
    %v214 = vand.u32 2147483647, %v204
    %vm215 = vcmp.eq.f32.partialorder %v214, 8.507059e+37
    %v216 = vand.u32 %v204, 2147483648
    %v217 = vor.u32 1.1754944e-38, %v216
    %v218 = vsel %vm215, %v217, %v213
    %v219 = vmul.f32 1.0, %v218
    %v220 = vtanh.pop %v200
    %v221 = vmul.f32 %v219, %v139
    %223 = vrot.lane.b32.xlu0 %v220, 32
    %v224 = vpop.permute.xlu0 %223
    %v226 = vmul.f32 %v219, %v224
    %228 = vrot.lane.b32.xlu0 %v226, 32
    %v229 = vpop.permute.xlu0 %228
    %v231 = vadd.f32 %v221, %v229
    %v232 = vtanh.pop %v231
    %234 = vrot.lane.b32.xlu0 %v232, 32
    %v235 = vpop.permute.xlu0 %234
    %v237 = vmul.f32 %v219, %v235
    %238 = vset.pattern.permute.xlu0 2
    %239 = vperm.xlu0 %238, %v51
    %v240 = vpop.permute.xlu0 %239
    %vm241 = vcmp.eq.s32.totalorder %v240, %v53
    %v242 = vsel %vm241, 1, 0
    %v243 = vcvt.s32.f32 %v242
    %245 = vrot.lane.b32.xlu0 %v237, 64
    %v246 = vpop.permute.xlu0 %245
    %v247 = vsel %vm60, %v246, 0
    %249 = vmatpush.msra.mxu0 0.0
    %250 = vmatpush.msra.mxu0 0.0
    %251 = vmatpush.msra.mxu0 0.0
    %252 = vmatpush.msra.mxu0 0.0
    %253 = vmatpush.msra.mxu0 0.0
    %254 = vmatpush.msra.mxu0 0.0
    %255 = vmatpush.msra.mxu0 0.0
    %256 = vmatpush.msra.mxu0 0.0
    %257 = vmatpush.msra.mxu0 0.0
    %258 = vmatpush.msra.mxu0 0.0
    %259 = vmatpush.msra.mxu0 0.0
    %260 = vmatpush.msra.mxu0 0.0
    %261 = vmatpush.msra.mxu0 %v49
    %262 = vmatpush.msra.mxu0 %v48
    %263 = vmatpush.msra.mxu0 %v47
    %264 = vmatpush.msra.mxu0 %v46
    %265 = vmatmul.f32.gmra.mxu0 %v247
    %v266 = vpop.f32.mrf.mxu0
    %v267 = vadd.f32 0.0, %v266
    %268 = vdwg.mxu0
    %v270 = vsel %vm84, %v243, 0
    %272 = vmatpush.msra.mxu0 0.0
    %273 = vmatpush.msra.mxu0 0.0
    %274 = vmatpush.msra.mxu0 0.0
    %275 = vmatpush.msra.mxu0 0.0
    %276 = vmatpush.msra.mxu0 0.0
    %277 = vmatpush.msra.mxu0 0.0
    %278 = vmatpush.msra.mxu0 0.0
    %279 = vmatpush.msra.mxu0 0.0
    %280 = vmatpush.msra.mxu0 0.0
    %281 = vmatpush.msra.mxu0 0.0
    %282 = vmatpush.msra.mxu0 0.0
    %283 = vmatpush.msra.mxu0 0.0
    %284 = vmatpush.msra.mxu0 0.0
    %285 = vmatpush.msra.mxu0 %v43
    %286 = vmatpush.msra.mxu0 %v42
    %287 = vmatpush.msra.mxu0 %v41
    %288 = vmatmul.f32.gmra.mxu0 %v270
    %v289 = vpop.f32.mrf.mxu0
    %v290 = vadd.f32 %v267, %v289
    %291 = vdwg.mxu0
    %v292 = vadd.f32 %v290, %v50
    %v293 = vxor.u32 %v292, 2147483648
    %v294 = vmul.f32 %v293, 1.442695
    %v295 = vpow.pop %v294
    %v296 = vadd.f32 %v295, 1.0
    %v297 = vrcp.pop %v296
    %v298 = vmul.f32 %v296, %v297
    %v299 = vsub.f32 1.0, %v298
    %v300 = vmul.f32 %v297, %v299
    %v301 = vadd.f32 %v297, %v300
    %vm302 = vweird.f32 %v296
    %vm303 = vweird.f32 %v297
    %vm304 = vmor %vm302, %vm303
    %v305 = vsel %vm304, %v297, %v301
    %v306 = vand.u32 2147483647, %v296
    %vm307 = vcmp.eq.f32.partialorder %v306, 8.507059e+37
    %v308 = vand.u32 %v296, 2147483648
    %v309 = vor.u32 1.1754944e-38, %v308
    %v310 = vsel %vm307, %v309, %v305
    %v311 = vmul.f32 1.0, %v310
    %v312 = vtanh.pop %v292
    %v313 = vmul.f32 %v311, %v231
    %315 = vrot.lane.b32.xlu0 %v312, 32
    %v316 = vpop.permute.xlu0 %315
    %v318 = vmul.f32 %v311, %v316
    %320 = vrot.lane.b32.xlu0 %v318, 32
    %v321 = vpop.permute.xlu0 %320
    %v323 = vadd.f32 %v313, %v321
    %v324 = vtanh.pop %v323
    %326 = vrot.lane.b32.xlu0 %v324, 32
    %v327 = vpop.permute.xlu0 %326
    %v329 = vmul.f32 %v311, %v327
    %330 = vset.pattern.permute.xlu0 3
    %331 = vperm.xlu0 %330, %v51
    %v332 = vpop.permute.xlu0 %331
    %vm333 = vcmp.eq.s32.totalorder %v332, %v53
    %v334 = vsel %vm333, 1, 0
    %v335 = vcvt.s32.f32 %v334
    %337 = vrot.lane.b32.xlu0 %v329, 64
    %v338 = vpop.permute.xlu0 %337
    %v339 = vsel %vm60, %v338, 0
    %341 = vmatpush.msra.mxu0 0.0
    %342 = vmatpush.msra.mxu0 0.0
    %343 = vmatpush.msra.mxu0 0.0
    %344 = vmatpush.msra.mxu0 0.0
    %345 = vmatpush.msra.mxu0 0.0
    %346 = vmatpush.msra.mxu0 0.0
    %347 = vmatpush.msra.mxu0 0.0
    %348 = vmatpush.msra.mxu0 0.0
    %349 = vmatpush.msra.mxu0 0.0
    %350 = vmatpush.msra.mxu0 0.0
    %351 = vmatpush.msra.mxu0 0.0
    %352 = vmatpush.msra.mxu0 0.0
    %353 = vmatpush.msra.mxu0 %v49
    %354 = vmatpush.msra.mxu0 %v48
    %355 = vmatpush.msra.mxu0 %v47
    %356 = vmatpush.msra.mxu0 %v46
    %357 = vmatmul.f32.gmra.mxu0 %v339
    %v358 = vpop.f32.mrf.mxu0
    %v359 = vadd.f32 0.0, %v358
    %360 = vdwg.mxu0
    %v362 = vsel %vm84, %v335, 0
    %364 = vmatpush.msra.mxu0 0.0
    %365 = vmatpush.msra.mxu0 0.0
    %366 = vmatpush.msra.mxu0 0.0
    %367 = vmatpush.msra.mxu0 0.0
    %368 = vmatpush.msra.mxu0 0.0
    %369 = vmatpush.msra.mxu0 0.0
    %370 = vmatpush.msra.mxu0 0.0
    %371 = vmatpush.msra.mxu0 0.0
    %372 = vmatpush.msra.mxu0 0.0
    %373 = vmatpush.msra.mxu0 0.0
    %374 = vmatpush.msra.mxu0 0.0
    %375 = vmatpush.msra.mxu0 0.0
    %376 = vmatpush.msra.mxu0 0.0
    %377 = vmatpush.msra.mxu0 %v43
    %378 = vmatpush.msra.mxu0 %v42
    %379 = vmatpush.msra.mxu0 %v41
    %380 = vmatmul.f32.gmra.mxu0 %v362
    %v381 = vpop.f32.mrf.mxu0
    %v382 = vadd.f32 %v359, %v381
    %383 = vdwg.mxu0
    %v384 = vadd.f32 %v382, %v50
    %v385 = vxor.u32 %v384, 2147483648
    %v386 = vmul.f32 %v385, 1.442695
    %v387 = vpow.pop %v386
    %v388 = vadd.f32 %v387, 1.0
    %v389 = vrcp.pop %v388
    %v390 = vmul.f32 %v388, %v389
    %v391 = vsub.f32 1.0, %v390
    %v392 = vmul.f32 %v389, %v391
    %v393 = vadd.f32 %v389, %v392
    %vm394 = vweird.f32 %v388
    %vm395 = vweird.f32 %v389
    %vm396 = vmor %vm394, %vm395
    %v397 = vsel %vm396, %v389, %v393
    %v398 = vand.u32 2147483647, %v388
    %vm399 = vcmp.eq.f32.partialorder %v398, 8.507059e+37
    %v400 = vand.u32 %v388, 2147483648
    %v401 = vor.u32 1.1754944e-38, %v400
    %v402 = vsel %vm399, %v401, %v397
    %v403 = vmul.f32 1.0, %v402
    %v404 = vtanh.pop %v384
    %v405 = vmul.f32 %v403, %v323
    %407 = vrot.lane.b32.xlu0 %v404, 32
    %v408 = vpop.permute.xlu0 %407
    %v410 = vmul.f32 %v403, %v408
    %412 = vrot.lane.b32.xlu0 %v410, 32
    %v413 = vpop.permute.xlu0 %412
    %v415 = vadd.f32 %v405, %v413
    %v416 = vtanh.pop %v415
    %418 = vrot.lane.b32.xlu0 %v416, 32
    %v419 = vpop.permute.xlu0 %418
    %v421 = vmul.f32 %v403, %v419
    %422 = vset.pattern.permute.xlu0 4
    %423 = vperm.xlu0 %422, %v51
    %v424 = vpop.permute.xlu0 %423
    %vm425 = vcmp.eq.s32.totalorder %v424, %v53
    %v426 = vsel %vm425, 1, 0
    %v427 = vcvt.s32.f32 %v426
    %429 = vrot.lane.b32.xlu0 %v421, 64
    %v430 = vpop.permute.xlu0 %429
    %v431 = vsel %vm60, %v430, 0
    %433 = vmatpush.msra.mxu0 0.0
    %434 = vmatpush.msra.mxu0 0.0
    %435 = vmatpush.msra.mxu0 0.0
    %436 = vmatpush.msra.mxu0 0.0
    %437 = vmatpush.msra.mxu0 0.0
    %438 = vmatpush.msra.mxu0 0.0
    %439 = vmatpush.msra.mxu0 0.0
    %440 = vmatpush.msra.mxu0 0.0
    %441 = vmatpush.msra.mxu0 0.0
    %442 = vmatpush.msra.mxu0 0.0
    %443 = vmatpush.msra.mxu0 0.0
    %444 = vmatpush.msra.mxu0 0.0
    %445 = vmatpush.msra.mxu0 %v49
    %446 = vmatpush.msra.mxu0 %v48
    %447 = vmatpush.msra.mxu0 %v47
    %448 = vmatpush.msra.mxu0 %v46
    %449 = vmatmul.f32.gmra.mxu0 %v431
    %v450 = vpop.f32.mrf.mxu0
    %v451 = vadd.f32 0.0, %v450
    %452 = vdwg.mxu0
    %v454 = vsel %vm84, %v427, 0
    %456 = vmatpush.msra.mxu0 0.0
    %457 = vmatpush.msra.mxu0 0.0
    %458 = vmatpush.msra.mxu0 0.0
    %459 = vmatpush.msra.mxu0 0.0
    %460 = vmatpush.msra.mxu0 0.0
    %461 = vmatpush.msra.mxu0 0.0
    %462 = vmatpush.msra.mxu0 0.0
    %463 = vmatpush.msra.mxu0 0.0
    %464 = vmatpush.msra.mxu0 0.0
    %465 = vmatpush.msra.mxu0 0.0
    %466 = vmatpush.msra.mxu0 0.0
    %467 = vmatpush.msra.mxu0 0.0
    %468 = vmatpush.msra.mxu0 0.0
    %469 = vmatpush.msra.mxu0 %v43
    %470 = vmatpush.msra.mxu0 %v42
    %471 = vmatpush.msra.mxu0 %v41
    %472 = vmatmul.f32.gmra.mxu0 %v454
    %v473 = vpop.f32.mrf.mxu0
    %v474 = vadd.f32 %v451, %v473
    %475 = vdwg.mxu0
    %v476 = vadd.f32 %v474, %v50
    %v477 = vxor.u32 %v476, 2147483648
    %v478 = vmul.f32 %v477, 1.442695
    %v479 = vpow.pop %v478
    %v480 = vadd.f32 %v479, 1.0
    %v481 = vrcp.pop %v480
    %v482 = vmul.f32 %v480, %v481
    %v483 = vsub.f32 1.0, %v482
    %v484 = vmul.f32 %v481, %v483
    %v485 = vadd.f32 %v481, %v484
    %vm486 = vweird.f32 %v480
    %vm487 = vweird.f32 %v481
    %vm488 = vmor %vm486, %vm487
    %v489 = vsel %vm488, %v481, %v485
    %v490 = vand.u32 2147483647, %v480
    %vm491 = vcmp.eq.f32.partialorder %v490, 8.507059e+37
    %v492 = vand.u32 %v480, 2147483648
    %v493 = vor.u32 1.1754944e-38, %v492
    %v494 = vsel %vm491, %v493, %v489
    %v495 = vmul.f32 1.0, %v494
    %v496 = vtanh.pop %v476
    %v497 = vmul.f32 %v495, %v415
    %499 = vrot.lane.b32.xlu0 %v496, 32
    %v500 = vpop.permute.xlu0 %499
    %v502 = vmul.f32 %v495, %v500
    %504 = vrot.lane.b32.xlu0 %v502, 32
    %v505 = vpop.permute.xlu0 %504
    %v507 = vadd.f32 %v497, %v505
    %v508 = vtanh.pop %v507
    %510 = vrot.lane.b32.xlu0 %v508, 32
    %v511 = vpop.permute.xlu0 %510
    %v513 = vmul.f32 %v495, %v511
    %514 = vset.pattern.permute.xlu0 5
    %515 = vperm.xlu0 %514, %v51
    %v516 = vpop.permute.xlu0 %515
    %vm517 = vcmp.eq.s32.totalorder %v516, %v53
    %v518 = vsel %vm517, 1, 0
    %v519 = vcvt.s32.f32 %v518
    %521 = vrot.lane.b32.xlu0 %v513, 64
    %v522 = vpop.permute.xlu0 %521
    %v523 = vsel %vm60, %v522, 0
    %525 = vmatpush.msra.mxu0 0.0
    %526 = vmatpush.msra.mxu0 0.0
    %527 = vmatpush.msra.mxu0 0.0
    %528 = vmatpush.msra.mxu0 0.0
    %529 = vmatpush.msra.mxu0 0.0
    %530 = vmatpush.msra.mxu0 0.0
    %531 = vmatpush.msra.mxu0 0.0
    %532 = vmatpush.msra.mxu0 0.0
    %533 = vmatpush.msra.mxu0 0.0
    %534 = vmatpush.msra.mxu0 0.0
    %535 = vmatpush.msra.mxu0 0.0
    %536 = vmatpush.msra.mxu0 0.0
    %537 = vmatpush.msra.mxu0 %v49
    %538 = vmatpush.msra.mxu0 %v48
    %539 = vmatpush.msra.mxu0 %v47
    %540 = vmatpush.msra.mxu0 %v46
    %541 = vmatmul.f32.gmra.mxu0 %v523
    %v542 = vpop.f32.mrf.mxu0
    %v543 = vadd.f32 0.0, %v542
    %544 = vdwg.mxu0
    %v546 = vsel %vm84, %v519, 0
    %548 = vmatpush.msra.mxu0 0.0
    %549 = vmatpush.msra.mxu0 0.0
    %550 = vmatpush.msra.mxu0 0.0
    %551 = vmatpush.msra.mxu0 0.0
    %552 = vmatpush.msra.mxu0 0.0
    %553 = vmatpush.msra.mxu0 0.0
    %554 = vmatpush.msra.mxu0 0.0
    %555 = vmatpush.msra.mxu0 0.0
    %556 = vmatpush.msra.mxu0 0.0
    %557 = vmatpush.msra.mxu0 0.0
    %558 = vmatpush.msra.mxu0 0.0
    %559 = vmatpush.msra.mxu0 0.0
    %560 = vmatpush.msra.mxu0 0.0
    %561 = vmatpush.msra.mxu0 %v43
    %562 = vmatpush.msra.mxu0 %v42
    %563 = vmatpush.msra.mxu0 %v41
    %564 = vmatmul.f32.gmra.mxu0 %v546
    %v565 = vpop.f32.mrf.mxu0
    %v566 = vadd.f32 %v543, %v565
    %567 = vdwg.mxu0
    %v568 = vadd.f32 %v566, %v50
    %v569 = vxor.u32 %v568, 2147483648
    %v570 = vmul.f32 %v569, 1.442695
    %v571 = vpow.pop %v570
    %v572 = vadd.f32 %v571, 1.0
    %v573 = vrcp.pop %v572
    %v574 = vmul.f32 %v572, %v573
    %v575 = vsub.f32 1.0, %v574
    %v576 = vmul.f32 %v573, %v575
    %v577 = vadd.f32 %v573, %v576
    %vm578 = vweird.f32 %v572
    %vm579 = vweird.f32 %v573
    %vm580 = vmor %vm578, %vm579
    %v581 = vsel %vm580, %v573, %v577
    %v582 = vand.u32 2147483647, %v572
    %vm583 = vcmp.eq.f32.partialorder %v582, 8.507059e+37
    %v584 = vand.u32 %v572, 2147483648
    %v585 = vor.u32 1.1754944e-38, %v584
    %v586 = vsel %vm583, %v585, %v581
    %v587 = vmul.f32 1.0, %v586
    %v588 = vtanh.pop %v568
    %v589 = vmul.f32 %v587, %v507
    %591 = vrot.lane.b32.xlu0 %v588, 32
    %v592 = vpop.permute.xlu0 %591
    %v594 = vmul.f32 %v587, %v592
    %596 = vrot.lane.b32.xlu0 %v594, 32
    %v597 = vpop.permute.xlu0 %596
    %v599 = vadd.f32 %v589, %v597
    %v600 = vtanh.pop %v599
    %602 = vrot.lane.b32.xlu0 %v600, 32
    %v603 = vpop.permute.xlu0 %602
    %v605 = vmul.f32 %v587, %v603
    %606 = vset.pattern.permute.xlu0 6
    %607 = vperm.xlu0 %606, %v51
    %v608 = vpop.permute.xlu0 %607
    %vm609 = vcmp.eq.s32.totalorder %v608, %v53
    %v610 = vsel %vm609, 1, 0
    %v611 = vcvt.s32.f32 %v610
    %613 = vrot.lane.b32.xlu0 %v605, 64
    %v614 = vpop.permute.xlu0 %613
    %v615 = vsel %vm60, %v614, 0
    %617 = vmatpush.msra.mxu0 0.0
    %618 = vmatpush.msra.mxu0 0.0
    %619 = vmatpush.msra.mxu0 0.0
    %620 = vmatpush.msra.mxu0 0.0
    %621 = vmatpush.msra.mxu0 0.0
    %622 = vmatpush.msra.mxu0 0.0
    %623 = vmatpush.msra.mxu0 0.0
    %624 = vmatpush.msra.mxu0 0.0
    %625 = vmatpush.msra.mxu0 0.0
    %626 = vmatpush.msra.mxu0 0.0
    %627 = vmatpush.msra.mxu0 0.0
    %628 = vmatpush.msra.mxu0 0.0
    %629 = vmatpush.msra.mxu0 %v49
    %630 = vmatpush.msra.mxu0 %v48
    %631 = vmatpush.msra.mxu0 %v47
    %632 = vmatpush.msra.mxu0 %v46
    %633 = vmatmul.f32.gmra.mxu0 %v615
    %v634 = vpop.f32.mrf.mxu0
    %v635 = vadd.f32 0.0, %v634
    %636 = vdwg.mxu0
    %v638 = vsel %vm84, %v611, 0
    %640 = vmatpush.msra.mxu0 0.0
    %641 = vmatpush.msra.mxu0 0.0
    %642 = vmatpush.msra.mxu0 0.0
    %643 = vmatpush.msra.mxu0 0.0
    %644 = vmatpush.msra.mxu0 0.0
    %645 = vmatpush.msra.mxu0 0.0
    %646 = vmatpush.msra.mxu0 0.0
    %647 = vmatpush.msra.mxu0 0.0
    %648 = vmatpush.msra.mxu0 0.0
    %649 = vmatpush.msra.mxu0 0.0
    %650 = vmatpush.msra.mxu0 0.0
    %651 = vmatpush.msra.mxu0 0.0
    %652 = vmatpush.msra.mxu0 0.0
    %653 = vmatpush.msra.mxu0 %v43
    %654 = vmatpush.msra.mxu0 %v42
    %655 = vmatpush.msra.mxu0 %v41
    %656 = vmatmul.f32.gmra.mxu0 %v638
    %v657 = vpop.f32.mrf.mxu0
    %v658 = vadd.f32 %v635, %v657
    %659 = vdwg.mxu0
    %v660 = vadd.f32 %v658, %v50
    %v661 = vxor.u32 %v660, 2147483648
    %v662 = vmul.f32 %v661, 1.442695
    %v663 = vpow.pop %v662
    %v664 = vadd.f32 %v663, 1.0
    %v665 = vrcp.pop %v664
    %v666 = vmul.f32 %v664, %v665
    %v667 = vsub.f32 1.0, %v666
    %v668 = vmul.f32 %v665, %v667
    %v669 = vadd.f32 %v665, %v668
    %vm670 = vweird.f32 %v664
    %vm671 = vweird.f32 %v665
    %vm672 = vmor %vm670, %vm671
    %v673 = vsel %vm672, %v665, %v669
    %v674 = vand.u32 2147483647, %v664
    %vm675 = vcmp.eq.f32.partialorder %v674, 8.507059e+37
    %v676 = vand.u32 %v664, 2147483648
    %v677 = vor.u32 1.1754944e-38, %v676
    %v678 = vsel %vm675, %v677, %v673
    %v679 = vmul.f32 1.0, %v678
    %v680 = vtanh.pop %v660
    %v681 = vmul.f32 %v679, %v599
    %683 = vrot.lane.b32.xlu0 %v680, 32
    %v684 = vpop.permute.xlu0 %683
    %v686 = vmul.f32 %v679, %v684
    %688 = vrot.lane.b32.xlu0 %v686, 32
    %v689 = vpop.permute.xlu0 %688
    %v691 = vadd.f32 %v681, %v689
    %v692 = vtanh.pop %v691
    %694 = vrot.lane.b32.xlu0 %v692, 32
    %v695 = vpop.permute.xlu0 %694
    %v697 = vmul.f32 %v679, %v695
    %698 = vset.pattern.permute.xlu0 7
    %699 = vperm.xlu0 %698, %v51
    %v700 = vpop.permute.xlu0 %699
    %vm701 = vcmp.eq.s32.totalorder %v700, %v53
    %v702 = vsel %vm701, 1, 0
    %v703 = vcvt.s32.f32 %v702
    %705 = vrot.lane.b32.xlu0 %v697, 64
    %v706 = vpop.permute.xlu0 %705
    %v707 = vsel %vm60, %v706, 0
    %709 = vmatpush.msra.mxu0 0.0
    %710 = vmatpush.msra.mxu0 0.0
    %711 = vmatpush.msra.mxu0 0.0
    %712 = vmatpush.msra.mxu0 0.0
    %713 = vmatpush.msra.mxu0 0.0
    %714 = vmatpush.msra.mxu0 0.0
    %715 = vmatpush.msra.mxu0 0.0
    %716 = vmatpush.msra.mxu0 0.0
    %717 = vmatpush.msra.mxu0 0.0
    %718 = vmatpush.msra.mxu0 0.0
    %719 = vmatpush.msra.mxu0 0.0
    %720 = vmatpush.msra.mxu0 0.0
    %721 = vmatpush.msra.mxu0 %v49
    %722 = vmatpush.msra.mxu0 %v48
    %723 = vmatpush.msra.mxu0 %v47
    %724 = vmatpush.msra.mxu0 %v46
    %725 = vmatmul.f32.gmra.mxu0 %v707
    %v726 = vpop.f32.mrf.mxu0
    %v727 = vadd.f32 0.0, %v726
    %728 = vdwg.mxu0
    %v730 = vsel %vm84, %v703, 0
    %732 = vmatpush.msra.mxu0 0.0
    %733 = vmatpush.msra.mxu0 0.0
    %734 = vmatpush.msra.mxu0 0.0
    %735 = vmatpush.msra.mxu0 0.0
    %736 = vmatpush.msra.mxu0 0.0
    %737 = vmatpush.msra.mxu0 0.0
    %738 = vmatpush.msra.mxu0 0.0
    %739 = vmatpush.msra.mxu0 0.0
    %740 = vmatpush.msra.mxu0 0.0
    %741 = vmatpush.msra.mxu0 0.0
    %742 = vmatpush.msra.mxu0 0.0
    %743 = vmatpush.msra.mxu0 0.0
    %744 = vmatpush.msra.mxu0 0.0
    %745 = vmatpush.msra.mxu0 %v43
    %746 = vmatpush.msra.mxu0 %v42
    %747 = vmatpush.msra.mxu0 %v41
    %748 = vmatmul.f32.gmra.mxu0 %v730
    %v749 = vpop.f32.mrf.mxu0
    %v750 = vadd.f32 %v727, %v749
    %751 = vdwg.mxu0
    %v752 = vadd.f32 %v750, %v50
    %v753 = vxor.u32 %v752, 2147483648
    %v754 = vmul.f32 %v753, 1.442695
    %v755 = vpow.pop %v754
    %v756 = vadd.f32 %v755, 1.0
    %v757 = vrcp.pop %v756
    %v758 = vmul.f32 %v756, %v757
    %v759 = vsub.f32 1.0, %v758
    %v760 = vmul.f32 %v757, %v759
    %v761 = vadd.f32 %v757, %v760
    %vm762 = vweird.f32 %v756
    %vm763 = vweird.f32 %v757
    %vm764 = vmor %vm762, %vm763
    %v765 = vsel %vm764, %v757, %v761
    %v766 = vand.u32 2147483647, %v756
    %vm767 = vcmp.eq.f32.partialorder %v766, 8.507059e+37
    %v768 = vand.u32 %v756, 2147483648
    %v769 = vor.u32 1.1754944e-38, %v768
    %v770 = vsel %vm767, %v769, %v765
    %v771 = vmul.f32 1.0, %v770
    %v772 = vtanh.pop %v752
    %v773 = vmul.f32 %v771, %v691
    %775 = vrot.lane.b32.xlu0 %v772, 32
    %v776 = vpop.permute.xlu0 %775
    %v778 = vmul.f32 %v771, %v776
    %780 = vrot.lane.b32.xlu0 %v778, 32
    %v781 = vpop.permute.xlu0 %780
    %v783 = vadd.f32 %v773, %v781
    %v784 = vtanh.pop %v783
    %786 = vrot.lane.b32.xlu0 %v784, 32
    %v787 = vpop.permute.xlu0 %786
    %v789 = vmul.f32 %v771, %v787
    %v790 = vperm.slane %v45, 0
    %792 = vrot.lane.b32.xlu0 %v790, 64
    %v793 = vpop.permute.xlu0 %792
    %v795 = vmul.f32 %v789, %v793
    %797 = vrot.lane.b32.xlu0 %v795, 64
    %v798 = vpop.permute.xlu0 %797
    %v800 = vsel %vm60, %v798, 0.0
    %801 = vadd.xlane.f32.xlu0 %v800
    %v802 = vpop.xlane.xlu0 %801
    %v803 = vadd.f32 %v802, %v790
    %v804 = vxor.u32 %v803, 2147483648
    %v805 = vmul.f32 %v804, 1.442695
    %v806 = vpow.pop %v805
    %v807 = vadd.f32 %v806, 1.0
    %v808 = vrcp.pop %v807
    %v809 = vmul.f32 %v807, %v808
    %v810 = vsub.f32 1.0, %v809
    %v811 = vmul.f32 %v808, %v810
    %v812 = vadd.f32 %v808, %v811
    %vm813 = vweird.f32 %v807
    %vm814 = vweird.f32 %v808
    %vm815 = vmor %vm813, %vm814
    %v816 = vsel %vm815, %v808, %v812
    %v817 = vand.u32 2147483647, %v807
    %vm818 = vcmp.eq.f32.partialorder %v817, 8.507059e+37
    %v819 = vand.u32 %v807, 2147483648
    %v820 = vor.u32 1.1754944e-38, %v819
    %v821 = vsel %vm818, %v820, %v816
    %v822 = vmul.f32 1.0, %v821
    %824 = vrot.lane.b32.xlu0 %v822, 96
    %v825 = vpop.permute.xlu0 %824
    %vm827 = vcmask 7168
    %828 = vst.msk [vmem:[%s2] sm:$0xff] %vm827, %v825
    // Predicated region
    $region18: #{tpu_custom_call.1} parent=1 // pred_check
      _
    $region19: #{tpu_custom_call.1} parent=1 // pred_check_branch
      %830 = sbr.rel (0) target = $region21
    $region20: #{tpu_custom_call.1} parent=1 // pred_region
      _
    $region21: #{tpu_custom_call.1} parent=1 // pred_fallthru
      _
    // Predicated region
    $region22: #{tpu_custom_call.1} parent=1 // pred_check
      _
    $region23: #{tpu_custom_call.1} parent=1 // pred_check_branch
      %832 = sbr.rel (0) target = $region25
    $region24: #{tpu_custom_call.1} parent=1 // pred_region
      _
    $region25: #{tpu_custom_call.1} parent=1 // pred_fallthru
      _
    %833 = vsyncpa [#allocation3], 1
    %834 = vsyncpa [#allocation5], 1

</llo_original>
